<compile_context>
chip_gen: v7x
topology: tpu7x:2x2x1
jax: 0.10.0
libtpu: 0.0.40
codegen_flags: <defaults>
</compile_context>

<pallas_src>
import jax
import jax.numpy as jnp
from jax.experimental import pallas as pl
from jax.experimental.pallas import tpu as pltpu


def _concat_linear_kernel(x_ref, y_ref, z_ref, wt_ref, b_ref, out_ref):
    # cat(x, y, z, dim=1) @ W.T  ==  x @ Wt[0:D] + y @ Wt[D:2D] + z @ Wt[2D:3D]
    # Static sublane-aligned row slices of the single resident weight slab;
    # all three dots accumulate in f32 on the MXU.
    d = x_ref.shape[1]
    acc = jnp.dot(x_ref[...], wt_ref[0:d, :], preferred_element_type=jnp.float32)
    acc = acc + jnp.dot(y_ref[...], wt_ref[d:2 * d, :],
                        preferred_element_type=jnp.float32)
    acc = acc + jnp.dot(z_ref[...], wt_ref[2 * d:3 * d, :],
                        preferred_element_type=jnp.float32)
    out_ref[...] = (acc + b_ref[...]).astype(out_ref.dtype)


def prepare_concat_three_params(weight, bias, compute_dtype=None):
    """One-time weight/bias re-layout (do this OUTSIDE the per-call hot path).

    weight : (O, 3*D)  PyTorch nn.Linear layout
    bias   : (O,)
    Returns (w_t, b2d, O) with
      w_t : (3*D, O_pad)  pre-transposed, lane-padded to a multiple of 128
      b2d : (1, O_pad)    lane-padded bias
    """
    O, _ = weight.shape
    O_pad = ((O + 127) // 128) * 128

    w_t = weight.T                                   # (3*D, O)
    w_t = jnp.pad(w_t, ((0, 0), (0, O_pad - O)))     # (3*D, O_pad), zero cols
    b2d = jnp.pad(bias, (0, O_pad - O)).reshape(1, O_pad)

    if compute_dtype is not None:
        w_t = w_t.astype(compute_dtype)
    return w_t, b2d, O


def concat_three_forward(x, y, z, w_t, b2d, out_dim, compute_dtype=None):
    """Mirrors ConcatThree.forward.

    x, y, z : (B, D) each
    w_t     : (3*D, O_pad) from prepare_concat_three_params
    b2d     : (1, O_pad)
    returns (x, y, z, output) with output = cat(x,y,z,dim=1) @ weight.T + bias
    """
    B, D = x.shape
    K3, O_pad = w_t.shape
    assert K3 == 3 * D
    assert y.shape == (B, D) and z.shape == (B, D)

    xc, yc, zc = x, y, z
    if compute_dtype is not None:
        xc = xc.astype(compute_dtype)
        yc = yc.astype(compute_dtype)
        zc = zc.astype(compute_dtype)

    # Small shapes -> single program, full-array blocks resident in VMEM.
    def full(shape):
        return pl.BlockSpec(shape, lambda: tuple(0 for _ in shape),
                            memory_space=pltpu.MemorySpace.VMEM)

    out_padded = pl.pallas_call(
        _concat_linear_kernel,
        out_shape=jax.ShapeDtypeStruct((B, O_pad), x.dtype),
        in_specs=[
            full((B, D)),        # x
            full((B, D)),        # y
            full((B, D)),        # z
            full((K3, O_pad)),   # single pre-transposed weight slab
            full((1, O_pad)),    # bias
        ],
        out_specs=full((B, O_pad)),  # lane-dense (multiple of 128) output tile
    )(xc, yc, zc, w_t, b2d)

    output = out_padded[:, :out_dim]
    return x, y, z, output


if __name__ == "__main__":
    # Small shapes consistent with the module: Linear(3*input_dim, output_dim).
    batch = 4
    input_dim = 32
    output_dim = 100

    key = jax.random.PRNGKey(0)
    kx, ky, kz, kw, kb = jax.random.split(key, 5)

    x = jax.random.normal(kx, (batch, input_dim), dtype=jnp.float32)
    y = jax.random.normal(ky, (batch, input_dim), dtype=jnp.float32)
    z = jax.random.normal(kz, (batch, input_dim), dtype=jnp.float32)

    # Deterministic synthetic Linear parameters (PyTorch layout: (out, 3*in)).
    weight = jax.random.normal(kw, (output_dim, 3 * input_dim),
                               dtype=jnp.float32) * 0.02
    bias = jax.random.normal(kb, (output_dim,), dtype=jnp.float32) * 0.02

    # One-time weight re-layout (amortized across calls).
    w_t, b2d, O = prepare_concat_three_params(weight, bias)

    xo, yo, zo, out = concat_three_forward(x, y, z, w_t, b2d, O)
    jax.block_until_ready(out)

    # Pure-JAX reference check (cat + matmul).
    ref = jnp.concatenate([x, y, z], axis=1) @ weight.T + bias
    assert out.shape == (batch, output_dim)
    assert jnp.allclose(out, ref, atol=1e-4, rtol=1e-4), "mismatch vs reference"
    assert (xo is x) and (yo is y) and (zo is z)

    print("KERNEL_OK")
</pallas_src>

<mosaic_0001>
module attributes {stable_mosaic.version = 11 : i64} {
  func.func @_concat_linear_kernel(%arg0: memref<4x32xf32, #tpu.memory_space<vmem>>, %arg1: memref<4x32xf32, #tpu.memory_space<vmem>>, %arg2: memref<4x32xf32, #tpu.memory_space<vmem>>, %arg3: memref<96x128xf32, #tpu.memory_space<vmem>>, %arg4: memref<1x128xf32, #tpu.memory_space<vmem>>, %arg5: memref<4x128xf32, #tpu.memory_space<vmem>>) attributes {dimension_semantics = [], scalar_prefetch = 0 : i64, scratch_operands = 0 : i64, tpu.core_type = #tpu.core_type<tc>} {
    %c0 = arith.constant 0 : index
    %c0_0 = arith.constant 0 : index
    %0 = vector.load %arg0[%c0, %c0_0] : memref<4x32xf32, #tpu.memory_space<vmem>>, vector<4x32xf32>
    %c0_1 = arith.constant 0 : index
    %c0_2 = arith.constant 0 : index
    %1 = vector.load %arg3[%c0_1, %c0_2] : memref<96x128xf32, #tpu.memory_space<vmem>>, vector<32x128xf32>
    %cst = arith.constant dense<0.000000e+00> : vector<4x128xf32>
    %2 = tpu.matmul %0, %1, %cst {dimension_numbers = #tpu.dot_dimension_numbers<[1], [0], [0], [1], [0, 0, 1, 1], [], []>} : vector<4x32xf32>, vector<32x128xf32>, vector<4x128xf32> -> vector<4x128xf32>
    %c0_3 = arith.constant 0 : index
    %c0_4 = arith.constant 0 : index
    %3 = vector.load %arg1[%c0_3, %c0_4] : memref<4x32xf32, #tpu.memory_space<vmem>>, vector<4x32xf32>
    %c32 = arith.constant 32 : index
    %c0_5 = arith.constant 0 : index
    %4 = vector.load %arg3[%c32, %c0_5] : memref<96x128xf32, #tpu.memory_space<vmem>>, vector<32x128xf32>
    %cst_6 = arith.constant dense<0.000000e+00> : vector<4x128xf32>
    %5 = tpu.matmul %3, %4, %cst_6 {dimension_numbers = #tpu.dot_dimension_numbers<[1], [0], [0], [1], [0, 0, 1, 1], [], []>} : vector<4x32xf32>, vector<32x128xf32>, vector<4x128xf32> -> vector<4x128xf32>
    %6 = arith.addf %2, %5 : vector<4x128xf32>
    %c0_7 = arith.constant 0 : index
    %c0_8 = arith.constant 0 : index
    %7 = vector.load %arg2[%c0_7, %c0_8] : memref<4x32xf32, #tpu.memory_space<vmem>>, vector<4x32xf32>
    %c64 = arith.constant 64 : index
    %c0_9 = arith.constant 0 : index
    %8 = vector.load %arg3[%c64, %c0_9] : memref<96x128xf32, #tpu.memory_space<vmem>>, vector<32x128xf32>
    %cst_10 = arith.constant dense<0.000000e+00> : vector<4x128xf32>
    %9 = tpu.matmul %7, %8, %cst_10 {dimension_numbers = #tpu.dot_dimension_numbers<[1], [0], [0], [1], [0, 0, 1, 1], [], []>} : vector<4x32xf32>, vector<32x128xf32>, vector<4x128xf32> -> vector<4x128xf32>
    %10 = arith.addf %6, %9 : vector<4x128xf32>
    %c0_11 = arith.constant 0 : index
    %c0_12 = arith.constant 0 : index
    %11 = vector.load %arg4[%c0_11, %c0_12] : memref<1x128xf32, #tpu.memory_space<vmem>>, vector<1x128xf32>
    %12 = vector.broadcast %11 : vector<1x128xf32> to vector<4x128xf32>
    %13 = arith.addf %10, %12 : vector<4x128xf32>
    %c0_13 = arith.constant 0 : index
    %c0_14 = arith.constant 0 : index
    %14 = vector.load %arg5[%c0_13, %c0_14] : memref<4x128xf32, #tpu.memory_space<vmem>>, vector<4x128xf32>
    tpu.vector_store %arg5[%c0_13, %c0_14], %13 {strides = array<i32>} : memref<4x128xf32, #tpu.memory_space<vmem>>, vector<4x128xf32>,
    return
  }
}

</mosaic_0001>

<llo_original>
// kernel: tpu_custom_call.1
$region0: #{tpu_custom_call.1}
  #allocation0 [shape = 'u32[]', space=smem, size = 0x4, offset = 0x4, fixed_abs, tag = 'smem constant byte address 0x4 - core index']
  #allocation1 [shape = 'u32[144,128]{1,0:T(1,128)}', space=vmem, size = 0x12000, scoped, tag = 'internal scratch']
  %s0 = inlined_call_operand.hbm [shape: f32[4,32], index: 0, kind: input, shape index: {}]
  %s1 = inlined_call_operand.hbm [shape: f32[4,32], index: 1, kind: input, shape index: {}]
  %s2 = inlined_call_operand.vmem [shape: f32[4,32], index: 2, kind: input, shape index: {}]
  %s3 = inlined_call_operand.hbm [shape: f32[96,128], index: 3, kind: input, shape index: {}]
  %s4 = inlined_call_operand.vmem [shape: f32[1,128], index: 4, kind: input, shape index: {}]
  %s5 = inlined_call_operand.hbm [shape: f32[4,128], index: 5, kind: output, shape index: {}]
  %s6 = sld [smem:[#allocation0]]
  $region42: #{tpu_custom_call.1} parent=0
    _
  %s8 = ssub.s32 1, %s6
  %s9 = scalar_select 0, %s8, %s6
  $region1: #{tpu_custom_call.1} parent=0
    #allocation2 [shape = 'u8[2048]{0}', space=vmem, size = 0x800, scoped, tag = 'input window, operand 0, single buffered']
    #allocation3 [shape = 's32[1]{0}', space=sflag, size = 0x4, scoped, tag = 'scoped memory for tpu_custom_call.1']
    #allocation4 [shape = 's32[1]{0}', space=sflag, size = 0x4, scoped, tag = 'scoped memory for tpu_custom_call.1']
    #allocation5 [shape = 'u8[2048]{0}', space=vmem, size = 0x800, scoped, tag = 'input window, operand 1, single buffered']
    #allocation6 [shape = 's32[1]{0}', space=sflag, size = 0x4, scoped, tag = 'scoped memory for tpu_custom_call.1']
    #allocation7 [shape = 'u8[49152]{0}', space=vmem, size = 0xc000, scoped, tag = 'input window, operand 3, single buffered']
    #allocation8 [shape = 'u8[2048]{0}', space=vmem, size = 0x800, scoped, tag = 'output window, operand 0, single buffered']
    %10 = vsyncpa [#allocation3], 0
    %11 = vsyncpa [#allocation6], 0
    %12 = vsyncpa [#allocation4], 0
    // Predicated region
    $region2: #{tpu_custom_call.1} parent=1 // pred_check
      _
    $region3: #{tpu_custom_call.1} parent=1 // pred_check_branch
      %14 = sbr.rel (0) target = $region5
    $region4: #{tpu_custom_call.1} parent=1 // pred_region
      %s16 = ssub.s32 64, 64
      %17 = vsyncadd [#allocation3], %s16
      %s19 = sshll.u32 [#allocation2], 4
      %s20 = int_to_ptr.vmem [resolvable:$true] %s19
      %22 = dma.hbm_to_vmem [thread:$0]  %s0, 64, %s20, [#allocation3]
    $region5: #{tpu_custom_call.1} parent=1 // pred_fallthru
      _
    // Predicated region
    $region6: #{tpu_custom_call.1} parent=1 // pred_check
      _
    $region7: #{tpu_custom_call.1} parent=1 // pred_check_branch
      %24 = sbr.rel (0) target = $region9
    $region8: #{tpu_custom_call.1} parent=1 // pred_region
      %s26 = ssub.s32 64, 64
      %27 = vsyncadd [#allocation6], %s26
      %s29 = sshll.u32 [#allocation5], 4
      %s30 = int_to_ptr.vmem [resolvable:$true] %s29
      %32 = dma.hbm_to_vmem [thread:$0]  %s1, 64, %s30, [#allocation6]
    $region9: #{tpu_custom_call.1} parent=1 // pred_fallthru
      _
    // Predicated region
    $region10: #{tpu_custom_call.1} parent=1 // pred_check
      _
    $region11: #{tpu_custom_call.1} parent=1 // pred_check_branch
      %34 = sbr.rel (0) target = $region13
    $region12: #{tpu_custom_call.1} parent=1 // pred_region
      _
    $region13: #{tpu_custom_call.1} parent=1 // pred_fallthru
      _
    // Predicated region
    $region14: #{tpu_custom_call.1} parent=1 // pred_check
      _
    $region15: #{tpu_custom_call.1} parent=1 // pred_check_branch
      %36 = sbr.rel (0) target = $region17
    $region16: #{tpu_custom_call.1} parent=1 // pred_region
      %s38 = ssub.s32 1536, 1536
      %39 = vsyncadd [#allocation6], %s38
      %s40 = sshll.u32 [#allocation7], 4
      %s41 = int_to_ptr.vmem [resolvable:$true] %s40
      %46 = dma.hbm_to_vmem [thread:$0]  %s3, 1536, %s41, [#allocation6], 128, 128, 8
    $region17: #{tpu_custom_call.1} parent=1 // pred_fallthru
      _
    // Predicated region
    $region18: #{tpu_custom_call.1} parent=1 // pred_check
      _
    $region19: #{tpu_custom_call.1} parent=1 // pred_check_branch
      %48 = sbr.rel (0) target = $region21
    $region20: #{tpu_custom_call.1} parent=1 // pred_region
      _
    $region21: #{tpu_custom_call.1} parent=1 // pred_fallthru
      _
    // Predicated region
    $region22: #{tpu_custom_call.1} parent=1 // pred_check
      _
    $region23: #{tpu_custom_call.1} parent=1 // pred_check_branch
      %50 = sbr.rel (0) target = $region25
    $region24: #{tpu_custom_call.1} parent=1 // pred_region
      %51 = dma.done [#allocation3], 64
    $region25: #{tpu_custom_call.1} parent=1 // pred_fallthru
      _
    // Predicated region
    $region26: #{tpu_custom_call.1} parent=1 // pred_check
      _
    $region27: #{tpu_custom_call.1} parent=1 // pred_check_branch
      %53 = sbr.rel (0) target = $region29
    $region28: #{tpu_custom_call.1} parent=1 // pred_region
      %54 = dma.done [#allocation6], 64
    $region29: #{tpu_custom_call.1} parent=1 // pred_fallthru
      _
    // Predicated region
    $region30: #{tpu_custom_call.1} parent=1 // pred_check
      _
    $region31: #{tpu_custom_call.1} parent=1 // pred_check_branch
      %56 = sbr.rel (0) target = $region33
    $region32: #{tpu_custom_call.1} parent=1 // pred_region
      %57 = dma.done [#allocation6], 1536
    $region33: #{tpu_custom_call.1} parent=1 // pred_fallthru
      _
    %v58 = vld [vmem:[#allocation2] sm:$0xf]
    %v59 = vld [vmem:[#allocation7] sm:$0xff]
    %v60 = vld [vmem:[#allocation7 + $0x8] sm:$0xff]
    %v61 = vld [vmem:[#allocation7 + $0x10] sm:$0xff]
    %v62 = vld [vmem:[#allocation7 + $0x18] sm:$0xff]
    %v63 = vld [vmem:[#allocation5] sm:$0xf]
    %v64 = vld [vmem:[#allocation7 + $0x20] sm:$0xff]
    %v65 = vld [vmem:[#allocation7 + $0x28] sm:$0xff]
    %v66 = vld [vmem:[#allocation7 + $0x30] sm:$0xff]
    %v67 = vld [vmem:[#allocation7 + $0x38] sm:$0xff]
    %vm68 = vcmask 261120
    %v70 = vsel %vm68, %v63, 0
    %72 = vmatprep.subr.mxu0 0.0
    %73 = vmatpush1.msra.mxu0 %v64
    %74 = vmatprep.subr.mxu0 0.0
    %75 = vmatpush1.msra.mxu0 %v65
    %76 = vmatprep.subr.mxu0 0.0
    %77 = vmatpush1.msra.mxu0 %v66
    %78 = vmatprep.subr.mxu0 0.0
    %79 = vmatpush1.msra.mxu0 %v67
    %80 = vmatprep.subr.mxu0 0.0
    %81 = vmatpush1.msra.mxu0 0.0
    %82 = vmatprep.subr.mxu0 0.0
    %83 = vmatpush1.msra.mxu0 0.0
    %84 = vmatprep.subr.mxu0 0.0
    %85 = vmatpush1.msra.mxu0 0.0
    %86 = vmatprep.subr.mxu0 0.0
    %87 = vmatpush1.msra.mxu0 0.0
    %88 = vmatprep.subr.mxu0 0.0
    %89 = vmatpush1.msra.mxu0 0.0
    %90 = vmatprep.subr.mxu0 0.0
    %91 = vmatpush1.msra.mxu0 0.0
    %92 = vmatprep.subr.mxu0 0.0
    %93 = vmatpush1.msra.mxu0 0.0
    %94 = vmatprep.subr.mxu0 0.0
    %95 = vmatpush1.msra.mxu0 0.0
    %96 = vmatprep.subr.mxu0 0.0
    %97 = vmatpush1.msra.mxu0 0.0
    %98 = vmatprep.subr.mxu0 0.0
    %99 = vmatpush1.msra.mxu0 0.0
    %100 = vmatprep.subr.mxu0 0.0
    %101 = vmatpush1.msra.mxu0 0.0
    %102 = vmatprep.subr.mxu0 0.0
    %103 = vmatpush1.msra.mxu0 0.0
    %104 = vmatprep.subr.mxu0 0.0
    %105 = vmatpush1.msra.mxu0 0.0
    %106 = vmatprep.subr.mxu0 0.0
    %107 = vmatpush1.msra.mxu0 0.0
    %108 = vmatprep.subr.mxu0 0.0
    %109 = vmatpush1.msra.mxu0 0.0
    %110 = vmatprep.subr.mxu0 0.0
    %111 = vmatpush1.msra.mxu0 0.0
    %112 = vmatprep.subr.mxu0 0.0
    %113 = vmatpush1.msra.mxu0 0.0
    %114 = vmatprep.subr.mxu0 0.0
    %115 = vmatpush1.msra.mxu0 0.0
    %116 = vmatprep.subr.mxu0 0.0
    %117 = vmatpush1.msra.mxu0 0.0
    %118 = vmatprep.subr.mxu0 0.0
    %119 = vmatpush1.msra.mxu0 0.0
    %120 = vmatprep.subr.mxu0 0.0
    %121 = vmatpush1.msra.mxu0 0.0
    %122 = vmatprep.subr.mxu0 0.0
    %123 = vmatpush1.msra.mxu0 0.0
    %124 = vmatprep.subr.mxu0 0.0
    %125 = vmatpush1.msra.mxu0 0.0
    %126 = vmatprep.subr.mxu0 0.0
    %127 = vmatpush1.msra.mxu0 0.0
    %128 = vmatprep.subr.mxu0 0.0
    %129 = vmatpush1.msra.mxu0 0.0
    %130 = vmatprep.subr.mxu0 0.0
    %131 = vmatpush1.msra.mxu0 0.0
    %132 = vmatprep.subr.mxu0 0.0
    %133 = vmatpush1.msra.mxu0 0.0
    %134 = vmatprep.subr.mxu0 0.0
    %135 = vmatpush1.msra.mxu0 0.0
    %136 = vmatprep.mubr.f32.mxu0 0.0
    %137 = vmatmul.mubr.f32.gmra.mrb[0].mxu0 %v70
    %v138 = vpop.f32.mrb[0].mxu0
    %v139 = vadd.f32 0.0, %v138
    %v140 = vpop.f32.mrb[0].mxu0
    %141 = vdwg.mxu0
    %v143 = vsel %vm68, %v58, 0
    %145 = vmatprep.subr.mxu0 0.0
    %146 = vmatpush1.msra.mxu0 %v59
    %147 = vmatprep.subr.mxu0 0.0
    %148 = vmatpush1.msra.mxu0 %v60
    %149 = vmatprep.subr.mxu0 0.0
    %150 = vmatpush1.msra.mxu0 %v61
    %151 = vmatprep.subr.mxu0 0.0
    %152 = vmatpush1.msra.mxu0 %v62
    %153 = vmatprep.subr.mxu0 0.0
    %154 = vmatpush1.msra.mxu0 0.0
    %155 = vmatprep.subr.mxu0 0.0
    %156 = vmatpush1.msra.mxu0 0.0
    %157 = vmatprep.subr.mxu0 0.0
    %158 = vmatpush1.msra.mxu0 0.0
    %159 = vmatprep.subr.mxu0 0.0
    %160 = vmatpush1.msra.mxu0 0.0
    %161 = vmatprep.subr.mxu0 0.0
    %162 = vmatpush1.msra.mxu0 0.0
    %163 = vmatprep.subr.mxu0 0.0
    %164 = vmatpush1.msra.mxu0 0.0
    %165 = vmatprep.subr.mxu0 0.0
    %166 = vmatpush1.msra.mxu0 0.0
    %167 = vmatprep.subr.mxu0 0.0
    %168 = vmatpush1.msra.mxu0 0.0
    %169 = vmatprep.subr.mxu0 0.0
    %170 = vmatpush1.msra.mxu0 0.0
    %171 = vmatprep.subr.mxu0 0.0
    %172 = vmatpush1.msra.mxu0 0.0
    %173 = vmatprep.subr.mxu0 0.0
    %174 = vmatpush1.msra.mxu0 0.0
    %175 = vmatprep.subr.mxu0 0.0
    %176 = vmatpush1.msra.mxu0 0.0
    %177 = vmatprep.subr.mxu0 0.0
    %178 = vmatpush1.msra.mxu0 0.0
    %179 = vmatprep.subr.mxu0 0.0
    %180 = vmatpush1.msra.mxu0 0.0
    %181 = vmatprep.subr.mxu0 0.0
    %182 = vmatpush1.msra.mxu0 0.0
    %183 = vmatprep.subr.mxu0 0.0
    %184 = vmatpush1.msra.mxu0 0.0
    %185 = vmatprep.subr.mxu0 0.0
    %186 = vmatpush1.msra.mxu0 0.0
    %187 = vmatprep.subr.mxu0 0.0
    %188 = vmatpush1.msra.mxu0 0.0
    %189 = vmatprep.subr.mxu0 0.0
    %190 = vmatpush1.msra.mxu0 0.0
    %191 = vmatprep.subr.mxu0 0.0
    %192 = vmatpush1.msra.mxu0 0.0
    %193 = vmatprep.subr.mxu0 0.0
    %194 = vmatpush1.msra.mxu0 0.0
    %195 = vmatprep.subr.mxu0 0.0
    %196 = vmatpush1.msra.mxu0 0.0
    %197 = vmatprep.subr.mxu0 0.0
    %198 = vmatpush1.msra.mxu0 0.0
    %199 = vmatprep.subr.mxu0 0.0
    %200 = vmatpush1.msra.mxu0 0.0
    %201 = vmatprep.subr.mxu0 0.0
    %202 = vmatpush1.msra.mxu0 0.0
    %203 = vmatprep.subr.mxu0 0.0
    %204 = vmatpush1.msra.mxu0 0.0
    %205 = vmatprep.subr.mxu0 0.0
    %206 = vmatpush1.msra.mxu0 0.0
    %207 = vmatprep.subr.mxu0 0.0
    %208 = vmatpush1.msra.mxu0 0.0
    %209 = vmatprep.mubr.f32.mxu0 0.0
    %210 = vmatmul.mubr.f32.gmra.mrb[0].mxu0 %v143
    %v211 = vpop.f32.mrb[0].mxu0
    %v212 = vadd.f32 %v139, %v211
    %v213 = vpop.f32.mrb[0].mxu0
    %214 = vdwg.mxu0
    %v215 = vld [vmem:[%s2] sm:$0xf]
    %v216 = vld [vmem:[#allocation7 + $0x40] sm:$0xff]
    %v217 = vld [vmem:[#allocation7 + $0x48] sm:$0xff]
    %v218 = vld [vmem:[#allocation7 + $0x50] sm:$0xff]
    %v219 = vld [vmem:[#allocation7 + $0x58] sm:$0xff]
    %v221 = vsel %vm68, %v215, 0
    %223 = vmatprep.subr.mxu0 0.0
    %224 = vmatpush1.msra.mxu0 %v216
    %225 = vmatprep.subr.mxu0 0.0
    %226 = vmatpush1.msra.mxu0 %v217
    %227 = vmatprep.subr.mxu0 0.0
    %228 = vmatpush1.msra.mxu0 %v218
    %229 = vmatprep.subr.mxu0 0.0
    %230 = vmatpush1.msra.mxu0 %v219
    %231 = vmatprep.subr.mxu0 0.0
    %232 = vmatpush1.msra.mxu0 0.0
    %233 = vmatprep.subr.mxu0 0.0
    %234 = vmatpush1.msra.mxu0 0.0
    %235 = vmatprep.subr.mxu0 0.0
    %236 = vmatpush1.msra.mxu0 0.0
    %237 = vmatprep.subr.mxu0 0.0
    %238 = vmatpush1.msra.mxu0 0.0
    %239 = vmatprep.subr.mxu0 0.0
    %240 = vmatpush1.msra.mxu0 0.0
    %241 = vmatprep.subr.mxu0 0.0
    %242 = vmatpush1.msra.mxu0 0.0
    %243 = vmatprep.subr.mxu0 0.0
    %244 = vmatpush1.msra.mxu0 0.0
    %245 = vmatprep.subr.mxu0 0.0
    %246 = vmatpush1.msra.mxu0 0.0
    %247 = vmatprep.subr.mxu0 0.0
    %248 = vmatpush1.msra.mxu0 0.0
    %249 = vmatprep.subr.mxu0 0.0
    %250 = vmatpush1.msra.mxu0 0.0
    %251 = vmatprep.subr.mxu0 0.0
    %252 = vmatpush1.msra.mxu0 0.0
    %253 = vmatprep.subr.mxu0 0.0
    %254 = vmatpush1.msra.mxu0 0.0
    %255 = vmatprep.subr.mxu0 0.0
    %256 = vmatpush1.msra.mxu0 0.0
    %257 = vmatprep.subr.mxu0 0.0
    %258 = vmatpush1.msra.mxu0 0.0
    %259 = vmatprep.subr.mxu0 0.0
    %260 = vmatpush1.msra.mxu0 0.0
    %261 = vmatprep.subr.mxu0 0.0
    %262 = vmatpush1.msra.mxu0 0.0
    %263 = vmatprep.subr.mxu0 0.0
    %264 = vmatpush1.msra.mxu0 0.0
    %265 = vmatprep.subr.mxu0 0.0
    %266 = vmatpush1.msra.mxu0 0.0
    %267 = vmatprep.subr.mxu0 0.0
    %268 = vmatpush1.msra.mxu0 0.0
    %269 = vmatprep.subr.mxu0 0.0
    %270 = vmatpush1.msra.mxu0 0.0
    %271 = vmatprep.subr.mxu0 0.0
    %272 = vmatpush1.msra.mxu0 0.0
    %273 = vmatprep.subr.mxu0 0.0
    %274 = vmatpush1.msra.mxu0 0.0
    %275 = vmatprep.subr.mxu0 0.0
    %276 = vmatpush1.msra.mxu0 0.0
    %277 = vmatprep.subr.mxu0 0.0
    %278 = vmatpush1.msra.mxu0 0.0
    %279 = vmatprep.subr.mxu0 0.0
    %280 = vmatpush1.msra.mxu0 0.0
    %281 = vmatprep.subr.mxu0 0.0
    %282 = vmatpush1.msra.mxu0 0.0
    %283 = vmatprep.subr.mxu0 0.0
    %284 = vmatpush1.msra.mxu0 0.0
    %285 = vmatprep.subr.mxu0 0.0
    %286 = vmatpush1.msra.mxu0 0.0
    %287 = vmatprep.mubr.f32.mxu0 0.0
    %288 = vmatmul.mubr.f32.gmra.mrb[0].mxu0 %v221
    %v289 = vpop.f32.mrb[0].mxu0
    %v290 = vadd.f32 0.0, %v289
    %v291 = vpop.f32.mrb[0].mxu0
    %292 = vdwg.mxu0
    %v293 = vadd.f32 %v212, %v290
    %v294 = vld [vmem:[%s4] sm:$0x1]
    %v296 = vlaneseq
    %v297 = vshrl.u32 %v296, 7
    %v298 = vsub.s32 0, %v297
    %v299 = vrot.slane %v294, %v298
    %v301 = vadd.f32 %v293, %v299
    %302 = vst [vmem:[#allocation8] sm:$0xf] %v301
    // Predicated region
    $region34: #{tpu_custom_call.1} parent=1 // pred_check
      _
    $region35: #{tpu_custom_call.1} parent=1 // pred_check_branch
      %304 = sbr.rel (0) target = $region37
    $region36: #{tpu_custom_call.1} parent=1 // pred_region
      %s306 = ssub.s32 64, 64
      %307 = vsyncadd [#allocation4], %s306
      %s309 = sshll.u32 [#allocation8], 4
      %s310 = int_to_ptr.vmem [resolvable:$true] %s309
      %312 = dma.vmem_to_hbm [thread:$0]  %s310, 64, %s5, [#allocation4]
    $region37: #{tpu_custom_call.1} parent=1 // pred_fallthru
      _
    // Predicated region
    $region38: #{tpu_custom_call.1} parent=1 // pred_check
      _
    $region39: #{tpu_custom_call.1} parent=1 // pred_check_branch
      %314 = sbr.rel (0) target = $region41
    $region40: #{tpu_custom_call.1} parent=1 // pred_region
      %315 = dma.done [#allocation4], 64
    $region41: #{tpu_custom_call.1} parent=1 // pred_fallthru
      _
    %316 = vsyncpa [#allocation3], 1
    %317 = vsyncpa [#allocation6], 1
    %318 = vsyncpa [#allocation4], 1

</llo_original>
